<compile_context>
chip_gen: v7x
topology: tpu7x:2x2x1
jax: 0.10.0
libtpu: 0.0.40
codegen_flags: <defaults>
</compile_context>

<pallas_src>
import jax
import jax.numpy as jnp
from jax.experimental import pallas as pl
from jax.experimental.pallas import tpu as pltpu


def _round_up(x, m):
    return (x + m - 1) // m * m


def _pick_block_m(batch):
    if batch <= 128:
        # Whole (padded) batch in a single grid step.
        return max(8, _round_up(batch, 8))
    # >= 2 grid steps so ("parallel",) can shard across v7x's 2 TensorCores;
    # 128 matches the 128x128 MXU tile, 256 for very large batches.
    return 256 if batch >= 2048 else 128


def _cls_head_kernel(x_ref, w1_ref, b1_ref, w2_ref, b2_ref, o_ref):
    # dropout(x) is identity in eval mode.
    # dense: [bm, in] @ [in, inner] with f32 accumulation on the MXU.
    h = jnp.dot(x_ref[...], w1_ref[...], preferred_element_type=jnp.float32)
    # Bias add + tanh in f32 (VPU + EUP) -- avoids bf16 VPU emulation on v5e.
    h = jnp.tanh(h + b1_ref[...])
    # out_proj: [bm, inner] @ [inner, nc_pad] with f32 accumulation.
    out = jnp.dot(h.astype(w2_ref.dtype), w2_ref[...],
                  preferred_element_type=jnp.float32)
    o_ref[...] = (out + b2_ref[...]).astype(o_ref.dtype)


def bart_classification_head(x, w1, b1, w2, b2, *, block_m=None,
                             compute_dtype=None):
    """BartClassificationHead forward (eval mode).

    x:  [B, input_dim]
    w1: [input_dim, inner_dim]    (PyTorch dense.weight transposed)
    b1: [inner_dim]
    w2: [inner_dim, num_classes]  (PyTorch out_proj.weight transposed)
    b2: [num_classes]
    compute_dtype: optional operand dtype (e.g. jnp.bfloat16 for v6e/v7x MXU
      throughput); biases, accumulation, bias-add and tanh stay in float32.
    """
    B, input_dim = x.shape
    inner_dim = w1.shape[1]
    num_classes = w2.shape[1]
    out_dtype = x.dtype

    if compute_dtype is not None:
        x = x.astype(compute_dtype)
        w1 = w1.astype(compute_dtype)
        w2 = w2.astype(compute_dtype)

    # Lane-dense output: pad num_classes to a multiple of 128 so the output
    # stores are full-width (unmasked) vst; sliced off below.
    nc_pad = _round_up(max(num_classes, 1), 128)
    if nc_pad != num_classes:
        w2 = jnp.pad(w2, ((0, 0), (0, nc_pad - num_classes)))
        b2 = jnp.pad(b2, (0, nc_pad - num_classes))

    b1_2d = b1.astype(jnp.float32).reshape(1, inner_dim)
    b2_2d = b2.astype(jnp.float32).reshape(1, nc_pad)

    if block_m is None:
        block_m = _pick_block_m(B)
    b_pad = _round_up(B, block_m)
    if b_pad != B:
        x = jnp.pad(x, ((0, b_pad - B), (0, 0)))

    # VMEM budget: double-buffered tiles + weights, plus headroom.
    w_bytes = (w1.size * w1.dtype.itemsize + w2.size * w2.dtype.itemsize
               + b1_2d.size * 4 + b2_2d.size * 4)
    blk_bytes = (block_m * input_dim * x.dtype.itemsize
                 + block_m * nc_pad * jnp.dtype(out_dtype).itemsize)
    need = 2 * (w_bytes + blk_bytes) + (4 << 20)
    vmem_limit = int(min(max(need, 32 << 20), 100 << 20))

    out = pl.pallas_call(
        _cls_head_kernel,
        out_shape=jax.ShapeDtypeStruct((b_pad, nc_pad), out_dtype),
        grid_spec=pl.GridSpec(
            grid=(b_pad // block_m,),
            in_specs=[
                pl.BlockSpec((block_m, input_dim), lambda i: (i, 0)),
                # Constant index maps: weights/biases stay VMEM-resident and
                # are not re-fetched across batch tiles.
                pl.BlockSpec((input_dim, inner_dim), lambda i: (0, 0)),
                pl.BlockSpec((1, inner_dim), lambda i: (0, 0)),
                pl.BlockSpec((inner_dim, nc_pad), lambda i: (0, 0)),
                pl.BlockSpec((1, nc_pad), lambda i: (0, 0)),
            ],
            out_specs=pl.BlockSpec((block_m, nc_pad), lambda i: (i, 0)),
        ),
        compiler_params=pltpu.CompilerParams(
            dimension_semantics=("parallel",),
            vmem_limit_bytes=vmem_limit,
        ),
    )(x, w1, b1_2d, w2, b2_2d)

    return out[:B, :num_classes]


def _reference(x, w1, b1, w2, b2):
    hp = jax.lax.Precision.HIGHEST
    h = jnp.tanh(jnp.dot(x, w1, precision=hp) + b1)
    return jnp.dot(h, w2, precision=hp) + b2


if __name__ == "__main__":
    input_dim, inner_dim, num_classes = 32, 64, 8

    key = jax.random.PRNGKey(0)
    kx, kw1, kb1, kw2, kb2, kx2 = jax.random.split(key, 6)

    # PyTorch Linear stores W as [out, in]; init in that convention, then
    # transpose to the [in, out] layout the kernel consumes (y = x @ W.T + b).
    bound1 = 1.0 / float(input_dim) ** 0.5
    W1_torch = jax.random.uniform(kw1, (inner_dim, input_dim), minval=-bound1,
                                  maxval=bound1, dtype=jnp.float32)
    b1 = jax.random.uniform(kb1, (inner_dim,), minval=-bound1, maxval=bound1,
                            dtype=jnp.float32)
    bound2 = 1.0 / float(inner_dim) ** 0.5
    W2_torch = jax.random.uniform(kw2, (num_classes, inner_dim), minval=-bound2,
                                  maxval=bound2, dtype=jnp.float32)
    b2 = jax.random.uniform(kb2, (num_classes,), minval=-bound2, maxval=bound2,
                            dtype=jnp.float32)
    w1, w2 = W1_torch.T, W2_torch.T   # [in, inner], [inner, num_classes]

    head = jax.jit(bart_classification_head,
                   static_argnames=("block_m", "compute_dtype"))

    # --- Test 1: small batch, f32 operands (whole batch, single grid step) ---
    batch = 8
    x = jax.random.normal(kx, (batch, input_dim), dtype=jnp.float32)
    out = jax.block_until_ready(head(x, w1, b1, w2, b2))
    ref = _reference(x, w1, b1, w2, b2)
    assert out.shape == (batch, num_classes)
    assert jnp.allclose(out, ref, atol=1e-4, rtol=1e-4), "f32 mismatch vs ref"

    # --- Test 2: larger batch, bf16 operands (padded batch -> 2 grid steps,
    #     lane-padded num_classes), f32 accumulation ---
    batch2 = 200
    x2 = jax.random.normal(kx2, (batch2, input_dim), dtype=jnp.float32)
    out2 = jax.block_until_ready(
        head(x2, w1, b1, w2, b2, compute_dtype=jnp.bfloat16))
    ref2 = _reference(x2, w1, b1, w2, b2)
    assert out2.shape == (batch2, num_classes)
    assert jnp.allclose(out2, ref2, atol=1e-1, rtol=1e-1), "bf16 mismatch vs ref"

    print("KERNEL_OK")
</pallas_src>

<mosaic_0001>
module attributes {stable_mosaic.version = 11 : i64} {
  func.func @_cls_head_kernel(%arg0: i32, %arg1: memref<8x32xf32, #tpu.memory_space<vmem>>, %arg2: memref<32x64xf32, #tpu.memory_space<vmem>>, %arg3: memref<1x64xf32, #tpu.memory_space<vmem>>, %arg4: memref<64x128xf32, #tpu.memory_space<vmem>>, %arg5: memref<1x128xf32, #tpu.memory_space<vmem>>, %arg6: memref<8x128xf32, #tpu.memory_space<vmem>>) attributes {dimension_semantics = [#tpu.dimension_semantics<parallel>], iteration_bounds = array<i64: 1>, scalar_prefetch = 0 : i64, scratch_operands = 0 : i64, tpu.core_type = #tpu.core_type<tc>, window_params = [{transform_indices = @transform_0, window_bounds = array<i64: 8, 32>}, {pipeline_mode = #tpu.pipeline_mode<synchronous>, transform_indices = @transform_1, window_bounds = array<i64: 32, 64>}, {pipeline_mode = #tpu.pipeline_mode<synchronous>, transform_indices = @transform_2, window_bounds = array<i64: 1, 64>}, {pipeline_mode = #tpu.pipeline_mode<synchronous>, transform_indices = @transform_3, window_bounds = array<i64: 64, 128>}, {pipeline_mode = #tpu.pipeline_mode<synchronous>, transform_indices = @transform_4, window_bounds = array<i64: 1, 128>}, {transform_indices = @transform_5, window_bounds = array<i64: 8, 128>}]} {
    %c0 = arith.constant 0 : index
    %c0_0 = arith.constant 0 : index
    %0 = vector.load %arg1[%c0, %c0_0] : memref<8x32xf32, #tpu.memory_space<vmem>>, vector<8x32xf32>
    %c0_1 = arith.constant 0 : index
    %c0_2 = arith.constant 0 : index
    %1 = vector.load %arg2[%c0_1, %c0_2] : memref<32x64xf32, #tpu.memory_space<vmem>>, vector<32x64xf32>
    %cst = arith.constant dense<0.000000e+00> : vector<8x64xf32>
    %2 = tpu.matmul %0, %1, %cst {dimension_numbers = #tpu.dot_dimension_numbers<[1], [0], [0], [1], [0, 0, 1, 1], [], []>} : vector<8x32xf32>, vector<32x64xf32>, vector<8x64xf32> -> vector<8x64xf32>
    %c0_3 = arith.constant 0 : index
    %c0_4 = arith.constant 0 : index
    %3 = vector.load %arg3[%c0_3, %c0_4] : memref<1x64xf32, #tpu.memory_space<vmem>>, vector<1x64xf32>
    %4 = vector.broadcast %3 : vector<1x64xf32> to vector<8x64xf32>
    %5 = arith.addf %2, %4 : vector<8x64xf32>
    %6 = math.tanh %5 : vector<8x64xf32>
    %c0_5 = arith.constant 0 : index
    %c0_6 = arith.constant 0 : index
    %7 = vector.load %arg4[%c0_5, %c0_6] : memref<64x128xf32, #tpu.memory_space<vmem>>, vector<64x128xf32>
    %cst_7 = arith.constant dense<0.000000e+00> : vector<8x128xf32>
    %8 = tpu.matmul %6, %7, %cst_7 {dimension_numbers = #tpu.dot_dimension_numbers<[1], [0], [0], [1], [0, 0, 1, 1], [], []>} : vector<8x64xf32>, vector<64x128xf32>, vector<8x128xf32> -> vector<8x128xf32>
    %c0_8 = arith.constant 0 : index
    %c0_9 = arith.constant 0 : index
    %9 = vector.load %arg5[%c0_8, %c0_9] : memref<1x128xf32, #tpu.memory_space<vmem>>, vector<1x128xf32>
    %10 = vector.broadcast %9 : vector<1x128xf32> to vector<8x128xf32>
    %11 = arith.addf %8, %10 : vector<8x128xf32>
    %c0_10 = arith.constant 0 : index
    %c0_11 = arith.constant 0 : index
    %12 = vector.load %arg6[%c0_10, %c0_11] : memref<8x128xf32, #tpu.memory_space<vmem>>, vector<8x128xf32>
    tpu.vector_store %arg6[%c0_10, %c0_11], %11 {strides = array<i32>} : memref<8x128xf32, #tpu.memory_space<vmem>>, vector<8x128xf32>,
    return
  }
  func.func @transform_0(%arg0: i32) -> (i32, i32) {
    %c0_i32 = arith.constant 0 : i32
    %c0_i32_0 = arith.constant 0 : i32
    return %arg0, %c0_i32 : i32, i32
  }
  func.func @transform_1(%arg0: i32) -> (i32, i32) {
    %c0_i32 = arith.constant 0 : i32
    %c0_i32_0 = arith.constant 0 : i32
    %c0_i32_1 = arith.constant 0 : i32
    return %c0_i32, %c0_i32_0 : i32, i32
  }
  func.func @transform_2(%arg0: i32) -> (i32, i32) {
    %c0_i32 = arith.constant 0 : i32
    %c0_i32_0 = arith.constant 0 : i32
    %c0_i32_1 = arith.constant 0 : i32
    return %c0_i32, %c0_i32_0 : i32, i32
  }
  func.func @transform_3(%arg0: i32) -> (i32, i32) {
    %c0_i32 = arith.constant 0 : i32
    %c0_i32_0 = arith.constant 0 : i32
    %c0_i32_1 = arith.constant 0 : i32
    return %c0_i32, %c0_i32_0 : i32, i32
  }
  func.func @transform_4(%arg0: i32) -> (i32, i32) {
    %c0_i32 = arith.constant 0 : i32
    %c0_i32_0 = arith.constant 0 : i32
    %c0_i32_1 = arith.constant 0 : i32
    return %c0_i32, %c0_i32_0 : i32, i32
  }
  func.func @transform_5(%arg0: i32) -> (i32, i32) {
    %c0_i32 = arith.constant 0 : i32
    %c0_i32_0 = arith.constant 0 : i32
    return %arg0, %c0_i32 : i32, i32
  }
}

</mosaic_0001>

<llo_original>
// kernel: bart_classification_head.1
$region0: #{bart_classification_head.1}
  #allocation0 [shape = 'u32[]', space=smem, size = 0x4, offset = 0x4, fixed_abs, tag = 'smem constant byte address 0x4 - core index']
  #allocation1 [shape = 'u32[144,128]{1,0:T(1,128)}', space=vmem, size = 0x12000, scoped, tag = 'internal scratch']
  %s0 = inlined_call_operand.vmem [shape: f32[8,32], index: 0, kind: input, shape index: {}]
  %s1 = inlined_call_operand.vmem [shape: f32[32,64], index: 1, kind: input, shape index: {}]
  %s2 = inlined_call_operand.vmem [shape: f32[1,64], index: 2, kind: input, shape index: {}]
  %s3 = inlined_call_operand.vmem [shape: f32[64,128], index: 3, kind: input, shape index: {}]
  %s4 = inlined_call_operand.vmem [shape: f32[1,128], index: 4, kind: input, shape index: {}]
  %s5 = inlined_call_operand.hbm [shape: f32[8,128], index: 5, kind: output, shape index: {}]
  %s6 = sld [smem:[#allocation0]]
  $region30: #{bart_classification_head.1} parent=0
    _
  %s8 = ssub.s32 1, %s6
  %s9 = scalar_select 0, %s8, %s6
  $region1: #{bart_classification_head.1} parent=0
    #allocation2 [shape = 'u8[4096]{0}', space=vmem, size = 0x1000, scoped, tag = 'output window, operand 0, single buffered']
    #allocation3 [shape = 's32[1]{0}', space=sflag, size = 0x4, scoped, tag = 'scoped memory for bart_classification_head.1']
    %10 = vsyncpa [#allocation3], 0
    // Predicated region
    $region2: #{bart_classification_head.1} parent=1 // pred_check
      _
    $region3: #{bart_classification_head.1} parent=1 // pred_check_branch
      %12 = sbr.rel (0) target = $region5
    $region4: #{bart_classification_head.1} parent=1 // pred_region
      _
    $region5: #{bart_classification_head.1} parent=1 // pred_fallthru
      _
    // Predicated region
    $region6: #{bart_classification_head.1} parent=1 // pred_check
      _
    $region7: #{bart_classification_head.1} parent=1 // pred_check_branch
      %14 = sbr.rel (0) target = $region9
    $region8: #{bart_classification_head.1} parent=1 // pred_region
      _
    $region9: #{bart_classification_head.1} parent=1 // pred_fallthru
      _
    // Predicated region
    $region10: #{bart_classification_head.1} parent=1 // pred_check
      _
    $region11: #{bart_classification_head.1} parent=1 // pred_check_branch
      %16 = sbr.rel (0) target = $region13
    $region12: #{bart_classification_head.1} parent=1 // pred_region
      _
    $region13: #{bart_classification_head.1} parent=1 // pred_fallthru
      _
    // Predicated region
    $region14: #{bart_classification_head.1} parent=1 // pred_check
      _
    $region15: #{bart_classification_head.1} parent=1 // pred_check_branch
      %18 = sbr.rel (0) target = $region17
    $region16: #{bart_classification_head.1} parent=1 // pred_region
      _
    $region17: #{bart_classification_head.1} parent=1 // pred_fallthru
      _
    // Predicated region
    $region18: #{bart_classification_head.1} parent=1 // pred_check
      _
    $region19: #{bart_classification_head.1} parent=1 // pred_check_branch
      %20 = sbr.rel (0) target = $region21
    $region20: #{bart_classification_head.1} parent=1 // pred_region
      _
    $region21: #{bart_classification_head.1} parent=1 // pred_fallthru
      _
    %v21 = vld [vmem:[%s0] sm:$0xff]
    %v22 = vld [vmem:[%s1] sm:$0xff]
    %v23 = vld [vmem:[%s1 + $0x8] sm:$0xff]
    %v24 = vld [vmem:[%s1 + $0x10] sm:$0xff]
    %v25 = vld [vmem:[%s1 + $0x18] sm:$0xff]
    %v26 = vld [vmem:[%s2] sm:$0x1]
    %v28 = vlaneseq
    %v29 = vshrl.u32 %v28, 7
    %v30 = vsub.s32 0, %v29
    %v31 = vrot.slane %v26, %v30
    %vm33 = vcmask 261120
    %v35 = vsel %vm33, %v21, 0
    %37 = vmatprep.subr.mxu0 0.0
    %38 = vmatpush1.msra.mxu0 %v22
    %39 = vmatprep.subr.mxu0 0.0
    %40 = vmatpush1.msra.mxu0 %v23
    %41 = vmatprep.subr.mxu0 0.0
    %42 = vmatpush1.msra.mxu0 %v24
    %43 = vmatprep.subr.mxu0 0.0
    %44 = vmatpush1.msra.mxu0 %v25
    %45 = vmatprep.subr.mxu0 0.0
    %46 = vmatpush1.msra.mxu0 0.0
    %47 = vmatprep.subr.mxu0 0.0
    %48 = vmatpush1.msra.mxu0 0.0
    %49 = vmatprep.subr.mxu0 0.0
    %50 = vmatpush1.msra.mxu0 0.0
    %51 = vmatprep.subr.mxu0 0.0
    %52 = vmatpush1.msra.mxu0 0.0
    %53 = vmatprep.subr.mxu0 0.0
    %54 = vmatpush1.msra.mxu0 0.0
    %55 = vmatprep.subr.mxu0 0.0
    %56 = vmatpush1.msra.mxu0 0.0
    %57 = vmatprep.subr.mxu0 0.0
    %58 = vmatpush1.msra.mxu0 0.0
    %59 = vmatprep.subr.mxu0 0.0
    %60 = vmatpush1.msra.mxu0 0.0
    %61 = vmatprep.subr.mxu0 0.0
    %62 = vmatpush1.msra.mxu0 0.0
    %63 = vmatprep.subr.mxu0 0.0
    %64 = vmatpush1.msra.mxu0 0.0
    %65 = vmatprep.subr.mxu0 0.0
    %66 = vmatpush1.msra.mxu0 0.0
    %67 = vmatprep.subr.mxu0 0.0
    %68 = vmatpush1.msra.mxu0 0.0
    %69 = vmatprep.subr.mxu0 0.0
    %70 = vmatpush1.msra.mxu0 0.0
    %71 = vmatprep.subr.mxu0 0.0
    %72 = vmatpush1.msra.mxu0 0.0
    %73 = vmatprep.subr.mxu0 0.0
    %74 = vmatpush1.msra.mxu0 0.0
    %75 = vmatprep.subr.mxu0 0.0
    %76 = vmatpush1.msra.mxu0 0.0
    %77 = vmatprep.subr.mxu0 0.0
    %78 = vmatpush1.msra.mxu0 0.0
    %79 = vmatprep.subr.mxu0 0.0
    %80 = vmatpush1.msra.mxu0 0.0
    %81 = vmatprep.subr.mxu0 0.0
    %82 = vmatpush1.msra.mxu0 0.0
    %83 = vmatprep.subr.mxu0 0.0
    %84 = vmatpush1.msra.mxu0 0.0
    %85 = vmatprep.subr.mxu0 0.0
    %86 = vmatpush1.msra.mxu0 0.0
    %87 = vmatprep.subr.mxu0 0.0
    %88 = vmatpush1.msra.mxu0 0.0
    %89 = vmatprep.subr.mxu0 0.0
    %90 = vmatpush1.msra.mxu0 0.0
    %91 = vmatprep.subr.mxu0 0.0
    %92 = vmatpush1.msra.mxu0 0.0
    %93 = vmatprep.subr.mxu0 0.0
    %94 = vmatpush1.msra.mxu0 0.0
    %95 = vmatprep.subr.mxu0 0.0
    %96 = vmatpush1.msra.mxu0 0.0
    %97 = vmatprep.subr.mxu0 0.0
    %98 = vmatpush1.msra.mxu0 0.0
    %99 = vmatprep.subr.mxu0 0.0
    %100 = vmatpush1.msra.mxu0 0.0
    %101 = vmatprep.mubr.f32.mxu0 0.0
    %102 = vmatmul.mubr.f32.gmra.mrb[0].mxu0 %v35
    %v103 = vpop.f32.mrb[0].mxu0
    %v104 = vadd.f32 %v31, %v103
    %v105 = vpop.f32.mrb[0].mxu0
    %106 = vdwg.mxu0
    %v107 = vtanh.pop %v104
    %v108 = vld [vmem:[%s3] sm:$0xff]
    %v109 = vld [vmem:[%s3 + $0x8] sm:$0xff]
    %v110 = vld [vmem:[%s3 + $0x10] sm:$0xff]
    %v111 = vld [vmem:[%s3 + $0x18] sm:$0xff]
    %v112 = vld [vmem:[%s3 + $0x20] sm:$0xff]
    %v113 = vld [vmem:[%s3 + $0x28] sm:$0xff]
    %v114 = vld [vmem:[%s3 + $0x30] sm:$0xff]
    %v115 = vld [vmem:[%s3 + $0x38] sm:$0xff]
    %v116 = vld [vmem:[%s4] sm:$0x1]
    %v118 = vlaneseq
    %v119 = vshrl.u32 %v118, 7
    %v120 = vsub.s32 0, %v119
    %v121 = vrot.slane %v116, %v120
    %vm123 = vcmask 523264
    %v125 = vsel %vm123, %v107, 0
    %127 = vmatprep.subr.mxu0 0.0
    %128 = vmatpush1.msra.mxu0 %v108
    %129 = vmatprep.subr.mxu0 0.0
    %130 = vmatpush1.msra.mxu0 %v109
    %131 = vmatprep.subr.mxu0 0.0
    %132 = vmatpush1.msra.mxu0 %v110
    %133 = vmatprep.subr.mxu0 0.0
    %134 = vmatpush1.msra.mxu0 %v111
    %135 = vmatprep.subr.mxu0 0.0
    %136 = vmatpush1.msra.mxu0 %v112
    %137 = vmatprep.subr.mxu0 0.0
    %138 = vmatpush1.msra.mxu0 %v113
    %139 = vmatprep.subr.mxu0 0.0
    %140 = vmatpush1.msra.mxu0 %v114
    %141 = vmatprep.subr.mxu0 0.0
    %142 = vmatpush1.msra.mxu0 %v115
    %143 = vmatprep.subr.mxu0 0.0
    %144 = vmatpush1.msra.mxu0 0.0
    %145 = vmatprep.subr.mxu0 0.0
    %146 = vmatpush1.msra.mxu0 0.0
    %147 = vmatprep.subr.mxu0 0.0
    %148 = vmatpush1.msra.mxu0 0.0
    %149 = vmatprep.subr.mxu0 0.0
    %150 = vmatpush1.msra.mxu0 0.0
    %151 = vmatprep.subr.mxu0 0.0
    %152 = vmatpush1.msra.mxu0 0.0
    %153 = vmatprep.subr.mxu0 0.0
    %154 = vmatpush1.msra.mxu0 0.0
    %155 = vmatprep.subr.mxu0 0.0
    %156 = vmatpush1.msra.mxu0 0.0
    %157 = vmatprep.subr.mxu0 0.0
    %158 = vmatpush1.msra.mxu0 0.0
    %159 = vmatprep.subr.mxu0 0.0
    %160 = vmatpush1.msra.mxu0 0.0
    %161 = vmatprep.subr.mxu0 0.0
    %162 = vmatpush1.msra.mxu0 0.0
    %163 = vmatprep.subr.mxu0 0.0
    %164 = vmatpush1.msra.mxu0 0.0
    %165 = vmatprep.subr.mxu0 0.0
    %166 = vmatpush1.msra.mxu0 0.0
    %167 = vmatprep.subr.mxu0 0.0
    %168 = vmatpush1.msra.mxu0 0.0
    %169 = vmatprep.subr.mxu0 0.0
    %170 = vmatpush1.msra.mxu0 0.0
    %171 = vmatprep.subr.mxu0 0.0
    %172 = vmatpush1.msra.mxu0 0.0
    %173 = vmatprep.subr.mxu0 0.0
    %174 = vmatpush1.msra.mxu0 0.0
    %175 = vmatprep.subr.mxu0 0.0
    %176 = vmatpush1.msra.mxu0 0.0
    %177 = vmatprep.subr.mxu0 0.0
    %178 = vmatpush1.msra.mxu0 0.0
    %179 = vmatprep.subr.mxu0 0.0
    %180 = vmatpush1.msra.mxu0 0.0
    %181 = vmatprep.subr.mxu0 0.0
    %182 = vmatpush1.msra.mxu0 0.0
    %183 = vmatprep.subr.mxu0 0.0
    %184 = vmatpush1.msra.mxu0 0.0
    %185 = vmatprep.subr.mxu0 0.0
    %186 = vmatpush1.msra.mxu0 0.0
    %187 = vmatprep.subr.mxu0 0.0
    %188 = vmatpush1.msra.mxu0 0.0
    %189 = vmatprep.subr.mxu0 0.0
    %190 = vmatpush1.msra.mxu0 0.0
    %191 = vmatprep.mubr.f32.mxu0 0.0
    %192 = vmatmul.mubr.f32.gmra.mrb[0].mxu0 %v125
    %v193 = vpop.f32.mrb[0].mxu0
    %v194 = vadd.f32 %v121, %v193
    %v195 = vpop.f32.mrb[0].mxu0
    %196 = vdwg.mxu0
    %197 = vst [vmem:[#allocation2] sm:$0xff] %v194
    // Predicated region
    $region22: #{bart_classification_head.1} parent=1 // pred_check
      _
    $region23: #{bart_classification_head.1} parent=1 // pred_check_branch
      %199 = sbr.rel (0) target = $region25
    $region24: #{bart_classification_head.1} parent=1 // pred_region
      %s201 = ssub.s32 128, 128
      %202 = vsyncadd [#allocation3], %s201
      %s204 = sshll.u32 [#allocation2], 4
      %s205 = int_to_ptr.vmem [resolvable:$true] %s204
      %207 = dma.vmem_to_hbm [thread:$0]  %s205, 128, %s5, [#allocation3]
    $region25: #{bart_classification_head.1} parent=1 // pred_fallthru
      _
    // Predicated region
    $region26: #{bart_classification_head.1} parent=1 // pred_check
      _
    $region27: #{bart_classification_head.1} parent=1 // pred_check_branch
      %209 = sbr.rel (0) target = $region29
    $region28: #{bart_classification_head.1} parent=1 // pred_region
      %210 = dma.done [#allocation3], 128
    $region29: #{bart_classification_head.1} parent=1 // pred_fallthru
      _
    %211 = vsyncpa [#allocation3], 1

</llo_original>
